<compile_context>
chip_gen: v6e
topology: v6e:2x2x1
jax: 0.10.0
libtpu: 0.0.40
codegen_flags: <defaults>
</compile_context>

<pallas_src>
import jax
import jax.numpy as jnp
from jax.experimental import pallas as pl
from jax.experimental.pallas import tpu as pltpu


LN_EPS = 1e-5     # torch.nn.LayerNorm default
LANE = 128
SUBLANE = 8


def get_hidden_layer_sizes(num_of_inputs, num_of_outputs, num_of_layers):
    out_sizes = []
    if num_of_layers > 1:
        diff = num_of_inputs - num_of_outputs
        for i in range(num_of_layers - 1):
            num_of_hidden = int(num_of_inputs - (i + 1) * diff / num_of_layers)
            out_sizes.append(num_of_hidden)
    out_sizes.append(num_of_outputs)
    return out_sizes


def _round_up(a, b):
    return (a + b - 1) // b * b


def _cdiv(a, b):
    return (a + b - 1) // b


# --------------------------------------------------------------------------- #
# Kernel
# --------------------------------------------------------------------------- #
def classifier_kernel(x_ref, w1_ref, b1_ref, w2_ref, b2_ref, out_ref):
    """Per batch tile: LN stats -> Linear (LN affine folded in) -> ReLU -> Linear.

    Strictly per-row, so garbage rows of a ragged boundary block are harmless
    (their outputs are masked out by Pallas and never reach HBM).
    """
    x = x_ref[...].astype(jnp.float32)                        # (TM, F)

    # LayerNorm statistics (biased variance, like torch). gamma/beta are
    # already folded into w1/b1, so only normalization happens here.
    mean = jnp.mean(x, axis=-1, keepdims=True)
    centered = x - mean
    var = jnp.mean(centered * centered, axis=-1, keepdims=True)
    xhat = centered * jax.lax.rsqrt(var + LN_EPS)             # (TM, F)

    # Linear 1 (+ folded LN affine) + ReLU.  Hidden dim is zero-padded to 128
    # lanes so h occupies full vregs; padded columns stay exactly 0 after ReLU.
    # (Default matmul precision; passes 1e-4 vs a HIGHEST-precision reference.)
    h = jnp.dot(xhat, w1_ref[...], preferred_element_type=jnp.float32)
    h = jnp.maximum(h + b1_ref[...], 0.0)                     # (TM, Hp)

    # Linear 2 (output layer, no activation).
    y = jnp.dot(h, w2_ref[...], preferred_element_type=jnp.float32)
    out_ref[...] = (y + b2_ref[...]).astype(out_ref.dtype)    # (TM, O)


# --------------------------------------------------------------------------- #
# One-time parameter preparation (hoisted out of the per-call path)
# --------------------------------------------------------------------------- #
def prepare_classifier_params(params):
    """Fold LayerNorm affine into Linear1 and lane-pad the hidden dim.

    Call once, cache the result, and pass it to classifier_forward on every call.
    """
    gamma, beta, w1, b1, w2, b2 = params
    F, H = w1.shape
    O = w2.shape[1]

    # xn = xhat*gamma + beta  =>  xn@W1 + b1 == xhat@(gamma[:,None]*W1) + (beta@W1 + b1)
    w1f = gamma.reshape(F, 1).astype(jnp.float32) * w1.astype(jnp.float32)
    b1f = jnp.dot(beta.reshape(1, F).astype(jnp.float32),
                  w1.astype(jnp.float32),
                  precision=jax.lax.Precision.HIGHEST) + b1.reshape(1, H).astype(jnp.float32)

    # Zero-pad the hidden dim to a lane multiple (128): vreg-aligned intermediate,
    # padded hidden units stay exactly 0 through ReLU so the result is unchanged.
    Hp = _round_up(H, LANE)
    w1p = jnp.zeros((F, Hp), jnp.float32).at[:, :H].set(w1f)
    b1p = jnp.zeros((1, Hp), jnp.float32).at[:, :H].set(b1f)
    w2p = jnp.zeros((Hp, O), jnp.float32).at[:H, :].set(w2.astype(jnp.float32))
    b2p = b2.reshape(1, O).astype(jnp.float32)
    return (w1p, b1p, w2p, b2p)


# --------------------------------------------------------------------------- #
# Wrapper
# --------------------------------------------------------------------------- #
def _choose_row_tile(B, row_tile):
    """Balanced batch tiles: multiple of 8 rows, <= row_tile, >= 2 grid steps
    for big batches (megacore), first block always fully in-bounds."""
    n_tiles = _cdiv(B, row_tile)
    if B >= 2048 and n_tiles < 2:
        n_tiles = 2                      # give both v7x TensorCores work
    tm = _round_up(_cdiv(B, n_tiles), SUBLANE)
    if tm > B:                           # keep the first block fully in-bounds;
        tm = (B // SUBLANE) * SUBLANE    # the ragged tail becomes a masked block
    return tm


def classifier_forward(x, prepared_params, *, row_tile=4096, out_dtype=None):
    """x: any shape (B, ...) that flattens to (B, num_of_inputs)."""
    w1p, b1p, w2p, b2p = prepared_params

    B = x.shape[0]
    x2d = x.reshape(B, -1)                                    # torch.nn.Flatten
    F = x2d.shape[1]
    assert F == w1p.shape[0], (
        f"flattened feature size {F} != prepared weight fan-in {w1p.shape[0]}")
    Hp = w1p.shape[1]
    O = w2p.shape[1]
    out_dtype = out_dtype or x.dtype

    # Only truly tiny batches get padded (< 8 rows, a few hundred bytes).
    B_eff = B
    if B < SUBLANE:
        x2d = jnp.pad(x2d, ((0, SUBLANE - B), (0, 0)))
        B_eff = SUBLANE

    TM = _choose_row_tile(B_eff, row_tile)
    grid = (_cdiv(B_eff, TM),)

    # Advisory cost so XLA can overlap this small custom call with neighbors.
    cost = pl.CostEstimate(
        flops=2 * B_eff * (F * Hp + Hp * O) + 8 * B_eff * F,
        transcendentals=B_eff,                                # one rsqrt per row
        bytes_accessed=(B_eff * (F + O) + F * Hp + Hp + Hp * O + O) * 4,
    )

    out = pl.pallas_call(
        classifier_kernel,
        out_shape=jax.ShapeDtypeStruct((B_eff, O), out_dtype),
        grid=grid,
        in_specs=[
            pl.BlockSpec((TM, F), lambda i: (i, 0)),   # streamed x row tiles
            pl.BlockSpec((F, Hp), lambda i: (0, 0)),   # VMEM-resident weights
            pl.BlockSpec((1, Hp), lambda i: (0, 0)),
            pl.BlockSpec((Hp, O), lambda i: (0, 0)),
            pl.BlockSpec((1, O), lambda i: (0, 0)),
        ],
        out_specs=pl.BlockSpec((TM, O), lambda i: (i, 0)),
        compiler_params=pltpu.CompilerParams(
            dimension_semantics=("parallel",),          # megacore sharding on v7x
            vmem_limit_bytes=32 * 1024 * 1024,          # big tiles safe on v5e too
        ),
        cost_estimate=cost,
    )(x2d, w1p, b1p, w2p, b2p)

    return out[:B] if B_eff != B else out


# --------------------------------------------------------------------------- #
# Synthetic parameters + pure-JAX reference
# --------------------------------------------------------------------------- #
def make_params(key, num_of_inputs, num_of_outputs, num_of_layers):
    """Deterministic synthetic parameters matching the torch module's shapes."""
    sizes = get_hidden_layer_sizes(num_of_inputs, num_of_outputs, num_of_layers)
    assert num_of_layers == 2, "this script builds the 2-layer configuration"
    hidden, out = sizes[0], sizes[1]

    k = jax.random.split(key, 6)
    # Non-trivial gamma/beta so the affine-folding path is actually exercised.
    gamma = 1.0 + 0.1 * jax.random.normal(k[4], (1, num_of_inputs), jnp.float32)
    beta = 0.1 * jax.random.normal(k[5], (1, num_of_inputs), jnp.float32)
    # torch Linear init scale: U(-1/sqrt(fan_in), 1/sqrt(fan_in)).
    bnd1 = 1.0 / (num_of_inputs ** 0.5)
    w1 = jax.random.uniform(k[0], (num_of_inputs, hidden), jnp.float32, -bnd1, bnd1)
    b1 = jax.random.uniform(k[1], (1, hidden), jnp.float32, -bnd1, bnd1)
    bnd2 = 1.0 / (hidden ** 0.5)
    w2 = jax.random.uniform(k[2], (hidden, out), jnp.float32, -bnd2, bnd2)
    b2 = jax.random.uniform(k[3], (1, out), jnp.float32, -bnd2, bnd2)
    return (gamma, beta, w1, b1, w2, b2)


def reference_forward(x, params):
    """Pure-JAX reference matching the torch semantics (unfused)."""
    gamma, beta, w1, b1, w2, b2 = params
    x2d = x.reshape(x.shape[0], -1).astype(jnp.float32)
    mean = jnp.mean(x2d, axis=-1, keepdims=True)
    var = jnp.mean((x2d - mean) ** 2, axis=-1, keepdims=True)
    xn = (x2d - mean) / jnp.sqrt(var + LN_EPS) * gamma + beta
    h = jnp.maximum(jnp.dot(xn, w1, precision=jax.lax.Precision.HIGHEST) + b1, 0.0)
    return jnp.dot(h, w2, precision=jax.lax.Precision.HIGHEST) + b2


if __name__ == "__main__":
    NUM_IN, NUM_OUT, NUM_LAYERS = 32, 8, 2

    key = jax.random.PRNGKey(0)
    kx1, kx2, kx3, kp = jax.random.split(key, 4)
    params = make_params(kp, NUM_IN, NUM_OUT, NUM_LAYERS)
    # Parameter prep happens exactly once; reused for every forward call.
    prepared = jax.block_until_ready(prepare_classifier_params(params))

    # 1) Small case matching the module: (B, C, L) = (2, 4, 8) -> flattens to 32.
    x_small = jax.random.normal(kx1, (2, 4, 8), jnp.float32)
    y_small = jax.block_until_ready(classifier_forward(x_small, prepared))
    assert y_small.shape == (2, NUM_OUT)
    assert jnp.allclose(y_small, reference_forward(x_small, params),
                        atol=1e-4, rtol=1e-4), "small-batch mismatch vs reference"

    # 2) Large batch: 4096 rows -> 2 balanced tiles of 2048 (megacore path).
    x_big = jax.random.normal(kx2, (4096, 4, 8), jnp.float32)
    y_big = jax.block_until_ready(classifier_forward(x_big, prepared))
    assert y_big.shape == (4096, NUM_OUT)
    assert jnp.allclose(y_big, reference_forward(x_big, params),
                        atol=1e-4, rtol=1e-4), "large-batch mismatch vs reference"

    # 3) Ragged batch: 1003 rows -> tile 1000 + masked boundary block (no jnp.pad of x).
    x_ragged = jax.random.normal(kx3, (1003, 4, 8), jnp.float32)
    y_ragged = jax.block_until_ready(classifier_forward(x_ragged, prepared))
    assert y_ragged.shape == (1003, NUM_OUT)
    assert jnp.allclose(y_ragged, reference_forward(x_ragged, params),
                        atol=1e-4, rtol=1e-4), "ragged-batch mismatch vs reference"

    print("KERNEL_OK")
</pallas_src>

<mosaic_0001>
module attributes {stable_mosaic.version = 11 : i64} {
  func.func @classifier_kernel(%arg0: i32, %arg1: memref<8x32xf32, #tpu.memory_space<vmem>>, %arg2: memref<32x128xf32, #tpu.memory_space<vmem>>, %arg3: memref<1x128xf32, #tpu.memory_space<vmem>>, %arg4: memref<128x8xf32, #tpu.memory_space<vmem>>, %arg5: memref<1x8xf32, #tpu.memory_space<vmem>>, %arg6: memref<8x8xf32, #tpu.memory_space<vmem>>) attributes {dimension_semantics = [#tpu.dimension_semantics<parallel>], iteration_bounds = array<i64: 1>, scalar_prefetch = 0 : i64, scratch_operands = 0 : i64, tpu.core_type = #tpu.core_type<tc>, window_params = [{transform_indices = @transform_0, window_bounds = array<i64: 8, 32>}, {pipeline_mode = #tpu.pipeline_mode<synchronous>, transform_indices = @transform_1, window_bounds = array<i64: 32, 128>}, {pipeline_mode = #tpu.pipeline_mode<synchronous>, transform_indices = @transform_2, window_bounds = array<i64: 1, 128>}, {pipeline_mode = #tpu.pipeline_mode<synchronous>, transform_indices = @transform_3, window_bounds = array<i64: 128, 8>}, {pipeline_mode = #tpu.pipeline_mode<synchronous>, transform_indices = @transform_4, window_bounds = array<i64: 1, 8>}, {transform_indices = @transform_5, window_bounds = array<i64: 8, 8>}]} {
    %c0 = arith.constant 0 : index
    %c0_0 = arith.constant 0 : index
    %0 = vector.load %arg1[%c0, %c0_0] : memref<8x32xf32, #tpu.memory_space<vmem>>, vector<8x32xf32>
    %cst = arith.constant dense<0.000000e+00> : vector<8xf32>
    %1 = vector.multi_reduction <add>, %0, %cst [1] : vector<8x32xf32> to vector<8xf32>
    %2 = vector.shape_cast %1 : vector<8xf32> to vector<8x1xf32>
    %cst_1 = arith.constant 3.200000e+01 : f32
    %3 = vector.broadcast %cst_1 : f32 to vector<8x1xf32>
    %4 = arith.divf %2, %3 : vector<8x1xf32>
    %5 = vector.broadcast %4 : vector<8x1xf32> to vector<8x32xf32>
    %6 = arith.subf %0, %5 : vector<8x32xf32>
    %7 = arith.mulf %6, %6 : vector<8x32xf32>
    %cst_2 = arith.constant dense<0.000000e+00> : vector<8xf32>
    %8 = vector.multi_reduction <add>, %7, %cst_2 [1] : vector<8x32xf32> to vector<8xf32>
    %9 = vector.shape_cast %8 : vector<8xf32> to vector<8x1xf32>
    %cst_3 = arith.constant 3.200000e+01 : f32
    %10 = vector.broadcast %cst_3 : f32 to vector<8x1xf32>
    %11 = arith.divf %9, %10 : vector<8x1xf32>
    %cst_4 = arith.constant 9.99999974E-6 : f32
    %12 = vector.broadcast %cst_4 : f32 to vector<8x1xf32>
    %13 = arith.addf %11, %12 : vector<8x1xf32>
    %14 = math.rsqrt %13 : vector<8x1xf32>
    %15 = vector.broadcast %14 : vector<8x1xf32> to vector<8x32xf32>
    %16 = arith.mulf %6, %15 : vector<8x32xf32>
    %c0_5 = arith.constant 0 : index
    %c0_6 = arith.constant 0 : index
    %17 = vector.load %arg2[%c0_5, %c0_6] : memref<32x128xf32, #tpu.memory_space<vmem>>, vector<32x128xf32>
    %cst_7 = arith.constant dense<0.000000e+00> : vector<8x128xf32>
    %18 = tpu.matmul %16, %17, %cst_7 {dimension_numbers = #tpu.dot_dimension_numbers<[1], [0], [0], [1], [0, 0, 1, 1], [], []>} : vector<8x32xf32>, vector<32x128xf32>, vector<8x128xf32> -> vector<8x128xf32>
    %c0_8 = arith.constant 0 : index
    %c0_9 = arith.constant 0 : index
    %19 = vector.load %arg3[%c0_8, %c0_9] : memref<1x128xf32, #tpu.memory_space<vmem>>, vector<1x128xf32>
    %20 = vector.broadcast %19 : vector<1x128xf32> to vector<8x128xf32>
    %21 = arith.addf %18, %20 : vector<8x128xf32>
    %cst_10 = arith.constant 0.000000e+00 : f32
    %22 = vector.broadcast %cst_10 : f32 to vector<8x128xf32>
    %23 = arith.maximumf %21, %22 : vector<8x128xf32>
    %c0_11 = arith.constant 0 : index
    %c0_12 = arith.constant 0 : index
    %24 = vector.load %arg4[%c0_11, %c0_12] : memref<128x8xf32, #tpu.memory_space<vmem>>, vector<128x8xf32>
    %cst_13 = arith.constant dense<0.000000e+00> : vector<8x8xf32>
    %25 = tpu.matmul %23, %24, %cst_13 {dimension_numbers = #tpu.dot_dimension_numbers<[1], [0], [0], [1], [0, 0, 1, 1], [], []>} : vector<8x128xf32>, vector<128x8xf32>, vector<8x8xf32> -> vector<8x8xf32>
    %c0_14 = arith.constant 0 : index
    %c0_15 = arith.constant 0 : index
    %26 = vector.load %arg5[%c0_14, %c0_15] : memref<1x8xf32, #tpu.memory_space<vmem>>, vector<1x8xf32>
    %27 = vector.broadcast %26 : vector<1x8xf32> to vector<8x8xf32>
    %28 = arith.addf %25, %27 : vector<8x8xf32>
    %c0_16 = arith.constant 0 : index
    %c0_17 = arith.constant 0 : index
    %29 = vector.load %arg6[%c0_16, %c0_17] : memref<8x8xf32, #tpu.memory_space<vmem>>, vector<8x8xf32>
    tpu.vector_store %arg6[%c0_16, %c0_17], %28 {strides = array<i32>} : memref<8x8xf32, #tpu.memory_space<vmem>>, vector<8x8xf32>,
    return
  }
  func.func @transform_0(%arg0: i32) -> (i32, i32) {
    %c0_i32 = arith.constant 0 : i32
    %c0_i32_0 = arith.constant 0 : i32
    return %arg0, %c0_i32 : i32, i32
  }
  func.func @transform_1(%arg0: i32) -> (i32, i32) {
    %c0_i32 = arith.constant 0 : i32
    %c0_i32_0 = arith.constant 0 : i32
    %c0_i32_1 = arith.constant 0 : i32
    return %c0_i32, %c0_i32_0 : i32, i32
  }
  func.func @transform_2(%arg0: i32) -> (i32, i32) {
    %c0_i32 = arith.constant 0 : i32
    %c0_i32_0 = arith.constant 0 : i32
    %c0_i32_1 = arith.constant 0 : i32
    return %c0_i32, %c0_i32_0 : i32, i32
  }
  func.func @transform_3(%arg0: i32) -> (i32, i32) {
    %c0_i32 = arith.constant 0 : i32
    %c0_i32_0 = arith.constant 0 : i32
    %c0_i32_1 = arith.constant 0 : i32
    return %c0_i32, %c0_i32_0 : i32, i32
  }
  func.func @transform_4(%arg0: i32) -> (i32, i32) {
    %c0_i32 = arith.constant 0 : i32
    %c0_i32_0 = arith.constant 0 : i32
    %c0_i32_1 = arith.constant 0 : i32
    return %c0_i32, %c0_i32_0 : i32, i32
  }
  func.func @transform_5(%arg0: i32) -> (i32, i32) {
    %c0_i32 = arith.constant 0 : i32
    %c0_i32_0 = arith.constant 0 : i32
    return %arg0, %c0_i32 : i32, i32
  }
}

</mosaic_0001>

<llo_original>
// kernel: tpu_custom_call.1
$region0: #{tpu_custom_call.1}
  #allocation0 [shape = 'u32[]', space=smem, size = 0x4, offset = 0x4, fixed_abs, tag = 'smem constant byte address 0x4 - core index']
  #allocation1 [shape = 'u32[144,128]{1,0:T(1,128)}', space=vmem, size = 0x12000, scoped, tag = 'internal scratch']
  %s0 = inlined_call_operand.vmem [shape: f32[8,32], index: 0, kind: input, shape index: {}]
  %s1 = inlined_call_operand.vmem [shape: f32[32,128], index: 1, kind: input, shape index: {}]
  %s2 = inlined_call_operand.vmem [shape: f32[1,128], index: 2, kind: input, shape index: {}]
  %s3 = inlined_call_operand.vmem [shape: f32[128,8], index: 3, kind: input, shape index: {}]
  %s4 = inlined_call_operand.vmem [shape: f32[1,8], index: 4, kind: input, shape index: {}]
  %s5 = inlined_call_operand.hbm [shape: f32[8,8], index: 5, kind: output, shape index: {}]
  %s6 = sld [smem:[#allocation0]]
  $region30: #{tpu_custom_call.1} parent=0
    _
  %s8 = ssub.s32 1, %s6
  %s9 = scalar_select 0, %s8, %s6
  $region1: #{tpu_custom_call.1} parent=0
    #allocation2 [shape = 'u8[4096]{0}', space=vmem, size = 0x1000, scoped, tag = 'output window, operand 0, single buffered']
    #allocation3 [shape = 's32[1]{0}', space=sflag, size = 0x4, scoped, tag = 'scoped memory for tpu_custom_call.1']
    %10 = vsyncpa [#allocation3], 0
    // Predicated region
    $region2: #{tpu_custom_call.1} parent=1 // pred_check
      _
    $region3: #{tpu_custom_call.1} parent=1 // pred_check_branch
      %12 = sbr.rel (0) target = $region5
    $region4: #{tpu_custom_call.1} parent=1 // pred_region
      _
    $region5: #{tpu_custom_call.1} parent=1 // pred_fallthru
      _
    // Predicated region
    $region6: #{tpu_custom_call.1} parent=1 // pred_check
      _
    $region7: #{tpu_custom_call.1} parent=1 // pred_check_branch
      %14 = sbr.rel (0) target = $region9
    $region8: #{tpu_custom_call.1} parent=1 // pred_region
      _
    $region9: #{tpu_custom_call.1} parent=1 // pred_fallthru
      _
    // Predicated region
    $region10: #{tpu_custom_call.1} parent=1 // pred_check
      _
    $region11: #{tpu_custom_call.1} parent=1 // pred_check_branch
      %16 = sbr.rel (0) target = $region13
    $region12: #{tpu_custom_call.1} parent=1 // pred_region
      _
    $region13: #{tpu_custom_call.1} parent=1 // pred_fallthru
      _
    // Predicated region
    $region14: #{tpu_custom_call.1} parent=1 // pred_check
      _
    $region15: #{tpu_custom_call.1} parent=1 // pred_check_branch
      %18 = sbr.rel (0) target = $region17
    $region16: #{tpu_custom_call.1} parent=1 // pred_region
      _
    $region17: #{tpu_custom_call.1} parent=1 // pred_fallthru
      _
    // Predicated region
    $region18: #{tpu_custom_call.1} parent=1 // pred_check
      _
    $region19: #{tpu_custom_call.1} parent=1 // pred_check_branch
      %20 = sbr.rel (0) target = $region21
    $region20: #{tpu_custom_call.1} parent=1 // pred_region
      _
    $region21: #{tpu_custom_call.1} parent=1 // pred_fallthru
      _
    %v21 = vld [vmem:[%s0] sm:$0xff]
    %vm22 = vcmask 261120
    %v23 = vsel %vm22, %v21, 0.0
    %24 = vadd.xlane.f32.xlu0 %v23
    %v25 = vpop.xlane.xlu0 %24
    %v26 = vrcp.pop 32.0
    %v27 = vmul.f32 %v25, %v26
    %v28 = vsub.f32 %v21, %v27
    %v29 = vmul.f32 %v28, %v28
    %v30 = vsel %vm22, %v29, 0.0
    %31 = vadd.xlane.f32.xlu0 %v30
    %v32 = vpop.xlane.xlu0 %31
    %v33 = vmul.f32 %v32, %v26
    %v34 = vadd.f32 %v33, 1e-05
    %v35 = vrsqrt.pop %v34
    %v36 = vmul.f32 %v28, %v35
    %v37 = vld [vmem:[%s1] sm:$0xff]
    %v38 = vld [vmem:[%s1 + $0x8] sm:$0xff]
    %v39 = vld [vmem:[%s1 + $0x10] sm:$0xff]
    %v40 = vld [vmem:[%s1 + $0x18] sm:$0xff]
    %v41 = vld [vmem:[%s2] sm:$0x1]
    %v43 = vlaneseq
    %v44 = vshrl.u32 %v43, 7
    %v45 = vsub.s32 0, %v44
    %v46 = vrot.slane %v41, %v45
    %v49 = vsel %vm22, %v36, 0
    %51 = vmatprep.subr.mxu0 0.0
    %52 = vmatpush1.msra.mxu0 0.0
    %53 = vmatprep.subr.mxu0 0.0
    %54 = vmatpush1.msra.mxu0 0.0
    %55 = vmatprep.subr.mxu0 0.0
    %56 = vmatpush1.msra.mxu0 0.0
    %57 = vmatprep.subr.mxu0 0.0
    %58 = vmatpush1.msra.mxu0 0.0
    %59 = vmatprep.subr.mxu0 0.0
    %60 = vmatpush1.msra.mxu0 0.0
    %61 = vmatprep.subr.mxu0 0.0
    %62 = vmatpush1.msra.mxu0 0.0
    %63 = vmatprep.subr.mxu0 0.0
    %64 = vmatpush1.msra.mxu0 0.0
    %65 = vmatprep.subr.mxu0 0.0
    %66 = vmatpush1.msra.mxu0 0.0
    %67 = vmatprep.subr.mxu0 0.0
    %68 = vmatpush1.msra.mxu0 0.0
    %69 = vmatprep.subr.mxu0 0.0
    %70 = vmatpush1.msra.mxu0 0.0
    %71 = vmatprep.subr.mxu0 0.0
    %72 = vmatpush1.msra.mxu0 0.0
    %73 = vmatprep.subr.mxu0 0.0
    %74 = vmatpush1.msra.mxu0 0.0
    %75 = vmatprep.subr.mxu0 0.0
    %76 = vmatpush1.msra.mxu0 %v40
    %77 = vmatprep.subr.mxu0 0.0
    %78 = vmatpush1.msra.mxu0 %v39
    %79 = vmatprep.subr.mxu0 0.0
    %80 = vmatpush1.msra.mxu0 %v38
    %81 = vmatprep.subr.mxu0 0.0
    %82 = vmatpush1.msra.mxu0 %v37
    %83 = vmatprep.subr.mxu0 0.0
    %84 = vmatpush2.msra.mxu0 0.0
    %85 = vmatprep.subr.mxu0 0.0
    %86 = vmatpush2.msra.mxu0 0.0
    %87 = vmatprep.subr.mxu0 0.0
    %88 = vmatpush2.msra.mxu0 0.0
    %89 = vmatprep.subr.mxu0 0.0
    %90 = vmatpush2.msra.mxu0 0.0
    %91 = vmatprep.subr.mxu0 0.0
    %92 = vmatpush2.msra.mxu0 0.0
    %93 = vmatprep.subr.mxu0 0.0
    %94 = vmatpush2.msra.mxu0 0.0
    %95 = vmatprep.subr.mxu0 0.0
    %96 = vmatpush2.msra.mxu0 0.0
    %97 = vmatprep.subr.mxu0 0.0
    %98 = vmatpush2.msra.mxu0 0.0
    %99 = vmatprep.subr.mxu0 0.0
    %100 = vmatpush2.msra.mxu0 0.0
    %101 = vmatprep.subr.mxu0 0.0
    %102 = vmatpush2.msra.mxu0 0.0
    %103 = vmatprep.subr.mxu0 0.0
    %104 = vmatpush2.msra.mxu0 0.0
    %105 = vmatprep.subr.mxu0 0.0
    %106 = vmatpush2.msra.mxu0 0.0
    %107 = vmatprep.subr.mxu0 0.0
    %108 = vmatpush2.msra.mxu0 0.0
    %109 = vmatprep.subr.mxu0 0.0
    %110 = vmatpush2.msra.mxu0 0.0
    %111 = vmatprep.subr.mxu0 0.0
    %112 = vmatpush2.msra.mxu0 0.0
    %113 = vmatprep.subr.mxu0 0.0
    %114 = vmatpush2.msra.mxu0 0.0
    %115 = vmatprep.mubr.f32.mxu0 0.0
    %116 = vmatmul.mubr.f32.gmra.mxu0 %v49
    %v117 = vpop.f32.mrf.mxu0
    %v118 = vadd.f32 %v46, %v117
    %v119 = vpop.f32.mrf.mxu0
    %120 = vdwg.mxu0
    %v121 = vmax.f32 %v118, 0.0
    %v122 = vld [vmem:[%s3] sm:$0xff]
    %v123 = vld [vmem:[%s3 + $0x8] sm:$0xff]
    %v124 = vld [vmem:[%s3 + $0x10] sm:$0xff]
    %v125 = vld [vmem:[%s3 + $0x18] sm:$0xff]
    %v126 = vld [vmem:[%s3 + $0x20] sm:$0xff]
    %v127 = vld [vmem:[%s3 + $0x28] sm:$0xff]
    %v128 = vld [vmem:[%s3 + $0x30] sm:$0xff]
    %v129 = vld [vmem:[%s3 + $0x38] sm:$0xff]
    %v130 = vld [vmem:[%s3 + $0x40] sm:$0xff]
    %v131 = vld [vmem:[%s3 + $0x48] sm:$0xff]
    %v132 = vld [vmem:[%s3 + $0x50] sm:$0xff]
    %v133 = vld [vmem:[%s3 + $0x58] sm:$0xff]
    %v134 = vld [vmem:[%s3 + $0x60] sm:$0xff]
    %v135 = vld [vmem:[%s3 + $0x68] sm:$0xff]
    %v136 = vld [vmem:[%s3 + $0x70] sm:$0xff]
    %v137 = vld [vmem:[%s3 + $0x78] sm:$0xff]
    %v138 = vld [vmem:[%s4] sm:$0x1]
    %v140 = vlaneseq
    %v141 = vshrl.u32 %v140, 7
    %v142 = vsub.s32 0, %v141
    %v143 = vrot.slane %v138, %v142
    %145 = vmatprep.subr.mxu0 0.0
    %146 = vmatpush1.msra.mxu0 %v137
    %147 = vmatprep.subr.mxu0 0.0
    %148 = vmatpush1.msra.mxu0 %v136
    %149 = vmatprep.subr.mxu0 0.0
    %150 = vmatpush1.msra.mxu0 %v135
    %151 = vmatprep.subr.mxu0 0.0
    %152 = vmatpush1.msra.mxu0 %v134
    %153 = vmatprep.subr.mxu0 0.0
    %154 = vmatpush1.msra.mxu0 %v133
    %155 = vmatprep.subr.mxu0 0.0
    %156 = vmatpush1.msra.mxu0 %v132
    %157 = vmatprep.subr.mxu0 0.0
    %158 = vmatpush1.msra.mxu0 %v131
    %159 = vmatprep.subr.mxu0 0.0
    %160 = vmatpush1.msra.mxu0 %v130
    %161 = vmatprep.subr.mxu0 0.0
    %162 = vmatpush1.msra.mxu0 %v129
    %163 = vmatprep.subr.mxu0 0.0
    %164 = vmatpush1.msra.mxu0 %v128
    %165 = vmatprep.subr.mxu0 0.0
    %166 = vmatpush1.msra.mxu0 %v127
    %167 = vmatprep.subr.mxu0 0.0
    %168 = vmatpush1.msra.mxu0 %v126
    %169 = vmatprep.subr.mxu0 0.0
    %170 = vmatpush1.msra.mxu0 %v125
    %171 = vmatprep.subr.mxu0 0.0
    %172 = vmatpush1.msra.mxu0 %v124
    %173 = vmatprep.subr.mxu0 0.0
    %174 = vmatpush1.msra.mxu0 %v123
    %175 = vmatprep.subr.mxu0 0.0
    %176 = vmatpush1.msra.mxu0 %v122
    %177 = vmatprep.subr.mxu0 0.0
    %178 = vmatpush2.msra.mxu0 0.0
    %179 = vmatprep.subr.mxu0 0.0
    %180 = vmatpush2.msra.mxu0 0.0
    %181 = vmatprep.subr.mxu0 0.0
    %182 = vmatpush2.msra.mxu0 0.0
    %183 = vmatprep.subr.mxu0 0.0
    %184 = vmatpush2.msra.mxu0 0.0
    %185 = vmatprep.subr.mxu0 0.0
    %186 = vmatpush2.msra.mxu0 0.0
    %187 = vmatprep.subr.mxu0 0.0
    %188 = vmatpush2.msra.mxu0 0.0
    %189 = vmatprep.subr.mxu0 0.0
    %190 = vmatpush2.msra.mxu0 0.0
    %191 = vmatprep.subr.mxu0 0.0
    %192 = vmatpush2.msra.mxu0 0.0
    %193 = vmatprep.subr.mxu0 0.0
    %194 = vmatpush2.msra.mxu0 0.0
    %195 = vmatprep.subr.mxu0 0.0
    %196 = vmatpush2.msra.mxu0 0.0
    %197 = vmatprep.subr.mxu0 0.0
    %198 = vmatpush2.msra.mxu0 0.0
    %199 = vmatprep.subr.mxu0 0.0
    %200 = vmatpush2.msra.mxu0 0.0
    %201 = vmatprep.subr.mxu0 0.0
    %202 = vmatpush2.msra.mxu0 0.0
    %203 = vmatprep.subr.mxu0 0.0
    %204 = vmatpush2.msra.mxu0 0.0
    %205 = vmatprep.subr.mxu0 0.0
    %206 = vmatpush2.msra.mxu0 0.0
    %207 = vmatprep.subr.mxu0 0.0
    %208 = vmatpush2.msra.mxu0 0.0
    %209 = vmatprep.mubr.f32.mxu0 0.0
    %210 = vmatmul.mubr.f32.gmra.mxu0 %v121
    %v211 = vpop.f32.mrf.mxu0
    %v212 = vadd.f32 %v143, %v211
    %v213 = vpop.f32.mrf.mxu0
    %214 = vdwg.mxu0
    %vm215 = vcmask 64512
    %216 = vst.msk [vmem:[#allocation2] sm:$0xff] %vm215, %v212
    // Predicated region
    $region22: #{tpu_custom_call.1} parent=1 // pred_check
      _
    $region23: #{tpu_custom_call.1} parent=1 // pred_check_branch
      %218 = sbr.rel (0) target = $region25
    $region24: #{tpu_custom_call.1} parent=1 // pred_region
      %s220 = ssub.s32 128, 128
      %221 = vsyncadd [#allocation3], %s220
      %s223 = sshll.u32 [#allocation2], 4
      %s224 = int_to_ptr.vmem [resolvable:$true] %s223
      %226 = dma.vmem_to_hbm [thread:$0]  %s224, 128, %s5, [#allocation3]
    $region25: #{tpu_custom_call.1} parent=1 // pred_fallthru
      _
    // Predicated region
    $region26: #{tpu_custom_call.1} parent=1 // pred_check
      _
    $region27: #{tpu_custom_call.1} parent=1 // pred_check_branch
      %228 = sbr.rel (0) target = $region29
    $region28: #{tpu_custom_call.1} parent=1 // pred_region
      %229 = dma.done [#allocation3], 128
    $region29: #{tpu_custom_call.1} parent=1 // pred_fallthru
      _
    %230 = vsyncpa [#allocation3], 1

</llo_original>
